<compile_context>
chip_gen: v7x
topology: tpu7x:2x2x1
jax: 0.10.0
libtpu: 0.0.40
codegen_flags: <defaults>
</compile_context>

<pallas_src>
import jax
import jax.numpy as jnp
from jax.experimental import pallas as pl
from jax.experimental.pallas import tpu as pltpu

STATE_SIZE = 9        # state is (batch, 9)
ACTION_SIZE = 3       # output is (batch, 3)
NUM_EXPERTS = 4
EXPERT_DIM = 32
NEG_SLOPE = 0.01

S1 = STATE_SIZE + 1                  # +1: constant-1 row folds biases into matmul
E_ALL = NUM_EXPERTS * EXPERT_DIM     # 128 (all experts concatenated; tile aligned)
GROUP_PAD = 8                        # gate group padded 4 -> 8 (one sublane tile)
G_PAD = ACTION_SIZE * GROUP_PAD      # 24 padded gate rows
FUSED = E_ALL + G_PAD                # 152 fused rows: [experts | padded gates]
NEG_BIG = -1e30                      # pad-row bias -> exp() underflows to exactly 0


def _round_up(a, b):
    return ((a + b - 1) // b) * b


def param_actor_kernel(xt_ref, wf_ref, wl_ref, bl_ref, out_ref):
    """One batch tile (on lanes) per grid step; weights stay resident in VMEM.

    Shapes seen by the kernel:
      xt_ref : (S1, bt)        x^T with a constant-1 row appended (bias folding)
      wf_ref : (FUSED, S1)     fused [experts | padded gates] weights (+ bias col)
      wl_ref : (G_PAD, E_ALL)  last-layer weights: row 8k+i holds wl[k] in the
                               expert-i columns (i<4), zero on the pad rows
      bl_ref : (A, 1)          last-layer biases
      out_ref: (A, bt)         out^T, lane-dense
    """
    bt = out_ref.shape[-1]

    # --- one fused MXU pass: all experts + all (padded) gate logits -----------
    h = jnp.dot(wf_ref[...], xt_ref[...],
                preferred_element_type=jnp.float32)              # (152, bt) f32

    e_all = h[:E_ALL, :]                                         # (128, bt)
    e_all = jnp.where(e_all >= 0.0, e_all, NEG_SLOPE * e_all)    # leaky_relu

    # --- per-group softmax (groups are 8-sublane tiles, so reshape is free) ---
    g3 = h[E_ALL:, :].reshape(ACTION_SIZE, GROUP_PAD, bt)        # (3, 8, bt)
    m = jnp.max(g3, axis=1, keepdims=True)                       # per-group max
    ex3 = jnp.exp(g3 - m)                                        # pad rows -> 0

    # --- MMoE mix + per-action last layer as one MXU matmul -------------------
    # s[8k+i, b] = expert_i(x_b) . wl[k]
    s = jnp.dot(wl_ref[...], e_all.astype(wl_ref.dtype),
                preferred_element_type=jnp.float32)              # (24, bt)
    s3 = s.reshape(ACTION_SIZE, GROUP_PAD, bt)

    numer = jnp.sum(ex3 * s3, axis=1)                            # (3, bt)
    denom = jnp.sum(ex3, axis=1)                                 # (3, bt), >= 1

    out = numer * pl.reciprocal(denom, approx=True) + bl_ref[...]
    out_ref[...] = out.astype(out_ref.dtype)


def _preprocess_params(params, mm_dtype):
    """Build the fused/padded weight matrices (cheap one-off XLA ops)."""
    wg, bg, we, be, wl, bl = params

    # Experts: rows 0..127, bias folded into the last column.
    w_exp = jnp.concatenate([we.T, be.T], axis=1)                  # (128, 10)

    # Gates: groups of NUM_EXPERTS rows padded to GROUP_PAD with weight=0 and a
    # very negative bias so pad logits give exp()==0 (per-group softmax safe).
    w_gate = jnp.concatenate([wg.T, bg.T], axis=1)                 # (12, 10)
    w_gate = w_gate.reshape(ACTION_SIZE, NUM_EXPERTS, S1)
    pad = jnp.concatenate(
        [jnp.zeros((ACTION_SIZE, GROUP_PAD - NUM_EXPERTS, STATE_SIZE), w_gate.dtype),
         jnp.full((ACTION_SIZE, GROUP_PAD - NUM_EXPERTS, 1), NEG_BIG, w_gate.dtype)],
        axis=2)
    w_gate = jnp.concatenate([w_gate, pad], axis=1).reshape(G_PAD, S1)

    wf = jnp.concatenate([w_exp, w_gate], axis=0).astype(mm_dtype)  # (152, 10)

    # Last layer scattered: row 8k+i holds wl[k] in expert-i's columns (i<4).
    core = jnp.einsum('kd,ij->kijd', wl, jnp.eye(NUM_EXPERTS, dtype=wl.dtype))
    core = core.reshape(ACTION_SIZE, NUM_EXPERTS, E_ALL)
    core = jnp.concatenate(
        [core, jnp.zeros((ACTION_SIZE, GROUP_PAD - NUM_EXPERTS, E_ALL), wl.dtype)],
        axis=1)
    wlbig = core.reshape(G_PAD, E_ALL).astype(mm_dtype)             # (24, 128)

    bl_t = bl.T.astype(jnp.float32)                                 # (3, 1)
    return wf, wlbig, bl_t


def param_actor_forward(x, params, *, block_b=4096, use_bf16=True):
    """x: (B, STATE_SIZE) float32 -> (B, ACTION_SIZE) float32."""
    B = x.shape[0]
    mm_dtype = jnp.bfloat16 if use_bf16 else jnp.float32
    wf, wlbig, bl_t = _preprocess_params(params, mm_dtype)

    # Batch lives on lanes -> tiles are multiples of 128.  For large batches
    # target >= 4 grid steps (>= 2 for the two v7x TensorCores + pipelining),
    # capped at block_b to stay well inside the 32 MiB scoped VMEM limit.
    if B >= 256:
        target = _round_up(pl.cdiv(B, 4), 128)
        bt = max(128, min(_round_up(block_b, 128), target))
        b_pad = _round_up(B, bt)
    else:
        bt = B
        b_pad = B

    # Wrapper-side layout plumbing: pad batch, transpose, append the 1-row.
    x_pad = x if b_pad == B else jnp.pad(x, ((0, b_pad - B), (0, 0)))
    xt = jnp.concatenate([x_pad.T, jnp.ones((1, b_pad), x.dtype)], axis=0)
    xt = xt.astype(mm_dtype)                                       # (10, b_pad)

    grid = (b_pad // bt,)
    grid_spec = pltpu.PrefetchScalarGridSpec(
        num_scalar_prefetch=0,
        grid=grid,
        in_specs=[
            pl.BlockSpec((S1, bt), lambda i: (0, i)),              # x^T tile
            pl.BlockSpec((FUSED, S1), lambda i: (0, 0)),           # fused weights
            pl.BlockSpec((G_PAD, E_ALL), lambda i: (0, 0)),        # scattered wl
            pl.BlockSpec((ACTION_SIZE, 1), lambda i: (0, 0)),      # last-layer bias
        ],
        out_specs=pl.BlockSpec((ACTION_SIZE, bt), lambda i: (0, i)),
    )

    out_t = pl.pallas_call(
        param_actor_kernel,
        out_shape=jax.ShapeDtypeStruct((ACTION_SIZE, b_pad), jnp.float32),
        grid_spec=grid_spec,
        compiler_params=pltpu.CompilerParams(
            dimension_semantics=("parallel",),   # megacore-shard the batch
            vmem_limit_bytes=32 * 1024 * 1024,   # conservative, v7x-safe
        ),
    )(xt, wf, wlbig, bl_t)

    return out_t[:, :B].T                                          # (B, 3)


def init_params(key):
    """Deterministic synthetic init mirroring the PyTorch __init__ shapes.

    Weights are stored transposed, (in_features, out_features):
      wg: (9, 12)  gates (3 groups of 4)     bg: (1, 12)
      we: (9, 128) experts (4 x 32, concat)  be: (1, 128)
      wl: (3, 32)  last layers               bl: (1, 3)
    """
    k_g, k_e, k_l = jax.random.split(key, 3)

    bound = 1.0 / (STATE_SIZE ** 0.5)
    wg = jax.random.uniform(k_g, (STATE_SIZE, ACTION_SIZE * NUM_EXPERTS),
                            jnp.float32, minval=-bound, maxval=bound)
    bg = jnp.zeros((1, ACTION_SIZE * NUM_EXPERTS), jnp.float32)

    gain = (2.0 / (1.0 + NEG_SLOPE ** 2)) ** 0.5
    std = gain / (STATE_SIZE ** 0.5)
    we = std * jax.random.normal(k_e, (STATE_SIZE, NUM_EXPERTS * EXPERT_DIM),
                                 jnp.float32)
    be = jnp.zeros((1, NUM_EXPERTS * EXPERT_DIM), jnp.float32)

    wl = 1e-4 * jax.random.normal(k_l, (ACTION_SIZE, EXPERT_DIM), jnp.float32)
    bl = jnp.zeros((1, ACTION_SIZE), jnp.float32)

    return wg, bg, we, be, wl, bl


def param_actor_reference(x, params):
    """Pure-JAX reference (mirrors the PyTorch forward) for validation."""
    wg, bg, we, be, wl, bl = params
    e_all = x @ we + be
    e_all = jnp.where(e_all >= 0.0, e_all, NEG_SLOPE * e_all)
    g_all = x @ wg + bg
    outs = []
    for k in range(ACTION_SIZE):
        gate = jax.nn.softmax(
            g_all[:, k * NUM_EXPERTS:(k + 1) * NUM_EXPERTS], axis=-1)
        mmoe = 0.0
        for i in range(NUM_EXPERTS):
            mmoe = mmoe + gate[:, i][:, None] * \
                e_all[:, i * EXPERT_DIM:(i + 1) * EXPERT_DIM]
        outs.append(mmoe @ wl[k][:, None] + bl[0, k])
    return jnp.concatenate(outs, axis=1)


if __name__ == "__main__":
    key = jax.random.PRNGKey(0)
    k_params, k_x1, k_x2 = jax.random.split(key, 3)
    params = init_params(k_params)

    # 1) Small single-tile batch, f32 matmul path: tight check vs. reference.
    #    (tolerance only loosened for the EUP approx reciprocal, ~2^-12 rel.)
    batch = 8
    x = jax.random.normal(k_x1, (batch, STATE_SIZE), jnp.float32)
    out = jax.block_until_ready(param_actor_forward(x, params, use_bf16=False))
    ref = jax.block_until_ready(param_actor_reference(x, params))
    assert out.shape == (batch, ACTION_SIZE)
    assert jnp.allclose(out, ref, rtol=1e-3, atol=1e-6), (out, ref)

    # 2) Larger batch exercising the lane-tiled grid (300 -> pad 384, 3 steps of
    #    128) and the default bf16 MXU operand path: looser tolerance.
    batch2 = 300
    x2 = jax.random.normal(k_x2, (batch2, STATE_SIZE), jnp.float32)
    out2 = jax.block_until_ready(param_actor_forward(x2, params, block_b=128))
    ref2 = jax.block_until_ready(param_actor_reference(x2, params))
    assert out2.shape == (batch2, ACTION_SIZE)
    assert jnp.allclose(out2, ref2, rtol=5e-2, atol=1e-4), (out2, ref2)

    print("KERNEL_OK")
</pallas_src>

<mosaic_0001>
module attributes {stable_mosaic.version = 11 : i64} {
  func.func @param_actor_kernel(%arg0: i32, %arg1: memref<10x8xf32, #tpu.memory_space<vmem>>, %arg2: memref<152x10xf32, #tpu.memory_space<vmem>>, %arg3: memref<24x128xf32, #tpu.memory_space<vmem>>, %arg4: memref<3x1xf32, #tpu.memory_space<vmem>>, %arg5: memref<3x8xf32, #tpu.memory_space<vmem>>) attributes {dimension_semantics = [#tpu.dimension_semantics<parallel>], iteration_bounds = array<i64: 1>, scalar_prefetch = 0 : i64, scratch_operands = 0 : i64, tpu.core_type = #tpu.core_type<tc>, window_params = [{transform_indices = @transform_0, window_bounds = array<i64: 10, 8>}, {pipeline_mode = #tpu.pipeline_mode<synchronous>, transform_indices = @transform_1, window_bounds = array<i64: 152, 10>}, {pipeline_mode = #tpu.pipeline_mode<synchronous>, transform_indices = @transform_2, window_bounds = array<i64: 24, 128>}, {pipeline_mode = #tpu.pipeline_mode<synchronous>, transform_indices = @transform_3, window_bounds = array<i64: 3, 1>}, {transform_indices = @transform_4, window_bounds = array<i64: 3, 8>}]} {
    %c0 = arith.constant 0 : index
    %c0_0 = arith.constant 0 : index
    %0 = vector.load %arg2[%c0, %c0_0] : memref<152x10xf32, #tpu.memory_space<vmem>>, vector<152x10xf32>
    %c0_1 = arith.constant 0 : index
    %c0_2 = arith.constant 0 : index
    %1 = vector.load %arg1[%c0_1, %c0_2] : memref<10x8xf32, #tpu.memory_space<vmem>>, vector<10x8xf32>
    %cst = arith.constant dense<0.000000e+00> : vector<152x8xf32>
    %2 = tpu.matmul %0, %1, %cst {dimension_numbers = #tpu.dot_dimension_numbers<[1], [0], [0], [1], [0, 0, 1, 1], [], []>} : vector<152x10xf32>, vector<10x8xf32>, vector<152x8xf32> -> vector<152x8xf32>
    %3 = vector.extract_strided_slice %2 {offsets = [0, 0], sizes = [128, 8], strides = [1, 1]} : vector<152x8xf32> to vector<128x8xf32>
    %cst_3 = arith.constant 0.000000e+00 : f32
    %4 = vector.broadcast %cst_3 : f32 to vector<128x8xf32>
    %5 = arith.cmpf oge, %3, %4 : vector<128x8xf32>
    %cst_4 = arith.constant 0.00999999977 : f32
    %6 = vector.broadcast %cst_4 : f32 to vector<128x8xf32>
    %7 = arith.mulf %6, %3 : vector<128x8xf32>
    %8 = arith.select %5, %3, %7 : vector<128x8xi1>, vector<128x8xf32>
    %9 = vector.extract_strided_slice %2 {offsets = [128, 0], sizes = [24, 8], strides = [1, 1]} : vector<152x8xf32> to vector<24x8xf32>
    %10 = vector.shape_cast %9 : vector<24x8xf32> to vector<3x8x8xf32>
    %cst_5 = arith.constant dense<0xFF800000> : vector<3x8xf32>
    %11 = vector.multi_reduction <maximumf>, %10, %cst_5 [1] : vector<3x8x8xf32> to vector<3x8xf32>
    %12 = vector.shape_cast %11 : vector<3x8xf32> to vector<3x1x8xf32>
    %13 = vector.broadcast %12 : vector<3x1x8xf32> to vector<3x8x8xf32>
    %14 = arith.subf %10, %13 : vector<3x8x8xf32>
    %15 = math.exp %14 : vector<3x8x8xf32>
    %c0_6 = arith.constant 0 : index
    %c0_7 = arith.constant 0 : index
    %16 = vector.load %arg3[%c0_6, %c0_7] : memref<24x128xf32, #tpu.memory_space<vmem>>, vector<24x128xf32>
    %cst_8 = arith.constant dense<0.000000e+00> : vector<24x8xf32>
    %17 = tpu.matmul %16, %8, %cst_8 {dimension_numbers = #tpu.dot_dimension_numbers<[1], [0], [0], [1], [0, 0, 1, 1], [], []>} : vector<24x128xf32>, vector<128x8xf32>, vector<24x8xf32> -> vector<24x8xf32>
    %18 = vector.shape_cast %17 : vector<24x8xf32> to vector<3x8x8xf32>
    %19 = arith.mulf %15, %18 : vector<3x8x8xf32>
    %cst_9 = arith.constant dense<0.000000e+00> : vector<3x8xf32>
    %20 = vector.multi_reduction <add>, %19, %cst_9 [1] : vector<3x8x8xf32> to vector<3x8xf32>
    %cst_10 = arith.constant dense<0.000000e+00> : vector<3x8xf32>
    %21 = vector.multi_reduction <add>, %15, %cst_10 [1] : vector<3x8x8xf32> to vector<3x8xf32>
    %22 = tpu.reciprocal %21 {approx = true} : vector<3x8xf32> -> vector<3x8xf32>
    %23 = arith.mulf %20, %22 : vector<3x8xf32>
    %c0_11 = arith.constant 0 : index
    %c0_12 = arith.constant 0 : index
    %24 = vector.load %arg4[%c0_11, %c0_12] : memref<3x1xf32, #tpu.memory_space<vmem>>, vector<3x1xf32>
    %25 = vector.broadcast %24 : vector<3x1xf32> to vector<3x8xf32>
    %26 = arith.addf %23, %25 : vector<3x8xf32>
    %c0_13 = arith.constant 0 : index
    %c0_14 = arith.constant 0 : index
    %27 = vector.load %arg5[%c0_13, %c0_14] : memref<3x8xf32, #tpu.memory_space<vmem>>, vector<3x8xf32>
    tpu.vector_store %arg5[%c0_13, %c0_14], %26 {strides = array<i32>} : memref<3x8xf32, #tpu.memory_space<vmem>>, vector<3x8xf32>,
    return
  }
  func.func @transform_0(%arg0: i32) -> (i32, i32) {
    %c0_i32 = arith.constant 0 : i32
    %c0_i32_0 = arith.constant 0 : i32
    return %c0_i32, %arg0 : i32, i32
  }
  func.func @transform_1(%arg0: i32) -> (i32, i32) {
    %c0_i32 = arith.constant 0 : i32
    %c0_i32_0 = arith.constant 0 : i32
    %c0_i32_1 = arith.constant 0 : i32
    return %c0_i32, %c0_i32_0 : i32, i32
  }
  func.func @transform_2(%arg0: i32) -> (i32, i32) {
    %c0_i32 = arith.constant 0 : i32
    %c0_i32_0 = arith.constant 0 : i32
    %c0_i32_1 = arith.constant 0 : i32
    return %c0_i32, %c0_i32_0 : i32, i32
  }
  func.func @transform_3(%arg0: i32) -> (i32, i32) {
    %c0_i32 = arith.constant 0 : i32
    %c0_i32_0 = arith.constant 0 : i32
    %c0_i32_1 = arith.constant 0 : i32
    return %c0_i32, %c0_i32_0 : i32, i32
  }
  func.func @transform_4(%arg0: i32) -> (i32, i32) {
    %c0_i32 = arith.constant 0 : i32
    %c0_i32_0 = arith.constant 0 : i32
    return %c0_i32, %arg0 : i32, i32
  }
}

</mosaic_0001>

<llo_original>
// kernel: tpu_custom_call.1
$region0: #{tpu_custom_call.1}
  #allocation0 [shape = 'u32[]', space=smem, size = 0x4, offset = 0x4, fixed_abs, tag = 'smem constant byte address 0x4 - core index']
  #allocation1 [shape = 'u32[144,128]{1,0:T(1,128)}', space=vmem, size = 0x12000, scoped, tag = 'internal scratch']
  %s0 = inlined_call_operand.vmem [shape: f32[10,8], index: 0, kind: input, shape index: {}]
  %s1 = inlined_call_operand.vmem [shape: f32[152,10], index: 1, kind: input, shape index: {}]
  %s2 = inlined_call_operand.vmem [shape: f32[24,128], index: 2, kind: input, shape index: {}]
  %s3 = inlined_call_operand.vmem [shape: f32[3,1], index: 3, kind: input, shape index: {}]
  %s4 = inlined_call_operand.hbm [shape: f32[3,8], index: 4, kind: output, shape index: {}]
  %s5 = sld [smem:[#allocation0]]
  $region26: #{tpu_custom_call.1} parent=0
    _
  %s7 = ssub.s32 1, %s5
  %s8 = scalar_select 0, %s7, %s5
  $region1: #{tpu_custom_call.1} parent=0
    #allocation2 [shape = 'u8[2048]{0}', space=vmem, size = 0x800, scoped, tag = 'output window, operand 0, single buffered']
    #allocation3 [shape = 's32[1]{0}', space=sflag, size = 0x4, scoped, tag = 'scoped memory for tpu_custom_call.1']
    %9 = vsyncpa [#allocation3], 0
    // Predicated region
    $region2: #{tpu_custom_call.1} parent=1 // pred_check
      _
    $region3: #{tpu_custom_call.1} parent=1 // pred_check_branch
      %11 = sbr.rel (0) target = $region5
    $region4: #{tpu_custom_call.1} parent=1 // pred_region
      _
    $region5: #{tpu_custom_call.1} parent=1 // pred_fallthru
      _
    // Predicated region
    $region6: #{tpu_custom_call.1} parent=1 // pred_check
      _
    $region7: #{tpu_custom_call.1} parent=1 // pred_check_branch
      %13 = sbr.rel (0) target = $region9
    $region8: #{tpu_custom_call.1} parent=1 // pred_region
      _
    $region9: #{tpu_custom_call.1} parent=1 // pred_fallthru
      _
    // Predicated region
    $region10: #{tpu_custom_call.1} parent=1 // pred_check
      _
    $region11: #{tpu_custom_call.1} parent=1 // pred_check_branch
      %15 = sbr.rel (0) target = $region13
    $region12: #{tpu_custom_call.1} parent=1 // pred_region
      _
    $region13: #{tpu_custom_call.1} parent=1 // pred_fallthru
      _
    // Predicated region
    $region14: #{tpu_custom_call.1} parent=1 // pred_check
      _
    $region15: #{tpu_custom_call.1} parent=1 // pred_check_branch
      %17 = sbr.rel (0) target = $region17
    $region16: #{tpu_custom_call.1} parent=1 // pred_region
      _
    $region17: #{tpu_custom_call.1} parent=1 // pred_fallthru
      _
    %v18 = vld [vmem:[%s1] sm:$0xff]
    %v19 = vld [vmem:[%s1 + $0x8] sm:$0xff]
    %v20 = vld [vmem:[%s1 + $0x10] sm:$0xff]
    %v21 = vld [vmem:[%s1 + $0x18] sm:$0xff]
    %v22 = vld [vmem:[%s1 + $0x20] sm:$0xff]
    %v23 = vld [vmem:[%s1 + $0x28] sm:$0xff]
    %v24 = vld [vmem:[%s1 + $0x30] sm:$0xff]
    %v25 = vld [vmem:[%s1 + $0x38] sm:$0xff]
    %v26 = vld [vmem:[%s1 + $0x40] sm:$0xff]
    %v27 = vld [vmem:[%s1 + $0x48] sm:$0xff]
    %v28 = vld [vmem:[%s1 + $0x50] sm:$0xff]
    %v29 = vld [vmem:[%s1 + $0x58] sm:$0xff]
    %v30 = vld [vmem:[%s1 + $0x60] sm:$0xff]
    %v31 = vld [vmem:[%s1 + $0x68] sm:$0xff]
    %v32 = vld [vmem:[%s1 + $0x70] sm:$0xff]
    %v33 = vld [vmem:[%s1 + $0x78] sm:$0xff]
    %v34 = vld [vmem:[%s1 + $0x80] sm:$0xff]
    %v35 = vld [vmem:[%s1 + $0x88] sm:$0xff]
    %v36 = vld [vmem:[%s1 + $0x90] sm:$0xff]
    %v37 = vld [vmem:[%s0] sm:$0xff]
    %v38 = vld [vmem:[%s0 + $0x8] sm:$0x3]
    %vm39 = vcmask 80896
    %v41 = vsel %vm39, %v18, 0
    %v44 = vsel %vm39, %v19, 0
    %v47 = vsel %vm39, %v20, 0
    %v50 = vsel %vm39, %v21, 0
    %v53 = vsel %vm39, %v22, 0
    %v56 = vsel %vm39, %v23, 0
    %v59 = vsel %vm39, %v24, 0
    %v62 = vsel %vm39, %v25, 0
    %v65 = vsel %vm39, %v26, 0
    %v68 = vsel %vm39, %v27, 0
    %v71 = vsel %vm39, %v28, 0
    %v74 = vsel %vm39, %v29, 0
    %v77 = vsel %vm39, %v30, 0
    %v80 = vsel %vm39, %v31, 0
    %v83 = vsel %vm39, %v32, 0
    %v86 = vsel %vm39, %v33, 0
    %v89 = vsel %vm39, %v34, 0
    %v92 = vsel %vm39, %v35, 0
    %v95 = vsel %vm39, %v36, 0
    %vm97 = vcmask 1041408
    %v99 = vsel %vm97, %v38, 0
    %101 = vmatprep.subr.mxu0 0.0
    %102 = vmatpush1.msra.mxu0 %v37
    %103 = vmatprep.subr.mxu0 0.0
    %104 = vmatpush1.msra.mxu0 %v99
    %105 = vmatprep.subr.mxu0 0.0
    %106 = vmatpush1.msra.mxu0 0.0
    %107 = vmatprep.subr.mxu0 0.0
    %108 = vmatpush1.msra.mxu0 0.0
    %109 = vmatprep.subr.mxu0 0.0
    %110 = vmatpush1.msra.mxu0 0.0
    %111 = vmatprep.subr.mxu0 0.0
    %112 = vmatpush1.msra.mxu0 0.0
    %113 = vmatprep.subr.mxu0 0.0
    %114 = vmatpush1.msra.mxu0 0.0
    %115 = vmatprep.subr.mxu0 0.0
    %116 = vmatpush1.msra.mxu0 0.0
    %117 = vmatprep.subr.mxu0 0.0
    %118 = vmatpush1.msra.mxu0 0.0
    %119 = vmatprep.subr.mxu0 0.0
    %120 = vmatpush1.msra.mxu0 0.0
    %121 = vmatprep.subr.mxu0 0.0
    %122 = vmatpush1.msra.mxu0 0.0
    %123 = vmatprep.subr.mxu0 0.0
    %124 = vmatpush1.msra.mxu0 0.0
    %125 = vmatprep.subr.mxu0 0.0
    %126 = vmatpush1.msra.mxu0 0.0
    %127 = vmatprep.subr.mxu0 0.0
    %128 = vmatpush1.msra.mxu0 0.0
    %129 = vmatprep.subr.mxu0 0.0
    %130 = vmatpush1.msra.mxu0 0.0
    %131 = vmatprep.subr.mxu0 0.0
    %132 = vmatpush1.msra.mxu0 0.0
    %133 = vmatprep.subr.mxu0 0.0
    %134 = vmatpush1.msra.mxu0 0.0
    %135 = vmatprep.subr.mxu0 0.0
    %136 = vmatpush1.msra.mxu0 0.0
    %137 = vmatprep.subr.mxu0 0.0
    %138 = vmatpush1.msra.mxu0 0.0
    %139 = vmatprep.subr.mxu0 0.0
    %140 = vmatpush1.msra.mxu0 0.0
    %141 = vmatprep.subr.mxu0 0.0
    %142 = vmatpush1.msra.mxu0 0.0
    %143 = vmatprep.subr.mxu0 0.0
    %144 = vmatpush1.msra.mxu0 0.0
    %145 = vmatprep.subr.mxu0 0.0
    %146 = vmatpush1.msra.mxu0 0.0
    %147 = vmatprep.subr.mxu0 0.0
    %148 = vmatpush1.msra.mxu0 0.0
    %149 = vmatprep.subr.mxu0 0.0
    %150 = vmatpush1.msra.mxu0 0.0
    %151 = vmatprep.subr.mxu0 0.0
    %152 = vmatpush1.msra.mxu0 0.0
    %153 = vmatprep.subr.mxu0 0.0
    %154 = vmatpush1.msra.mxu0 0.0
    %155 = vmatprep.subr.mxu0 0.0
    %156 = vmatpush1.msra.mxu0 0.0
    %157 = vmatprep.subr.mxu0 0.0
    %158 = vmatpush1.msra.mxu0 0.0
    %159 = vmatprep.subr.mxu0 0.0
    %160 = vmatpush1.msra.mxu0 0.0
    %161 = vmatprep.subr.mxu0 0.0
    %162 = vmatpush1.msra.mxu0 0.0
    %163 = vmatprep.subr.mxu0 0.0
    %164 = vmatpush1.msra.mxu0 0.0
    %165 = vmatprep.mubr.f32.mxu0 0.0
    %166 = vmatmul.mubr.f32.gmra.mrb[0].mxu0 %v41
    %v167 = vpop.f32.mrb[0].mxu0
    %v168 = vadd.f32 0.0, %v167
    %v169 = vpop.f32.mrb[0].mxu0
    %170 = vmatprep.mubr.f32.mxu0 0.0
    %171 = vmatmul.mubr.f32.gmra.mrb[0].mxu0 %v44
    %v172 = vpop.f32.mrb[0].mxu0
    %v173 = vadd.f32 0.0, %v172
    %v174 = vpop.f32.mrb[0].mxu0
    %175 = vmatprep.mubr.f32.mxu0 0.0
    %176 = vmatmul.mubr.f32.gmra.mrb[0].mxu0 %v47
    %v177 = vpop.f32.mrb[0].mxu0
    %v178 = vadd.f32 0.0, %v177
    %v179 = vpop.f32.mrb[0].mxu0
    %180 = vmatprep.mubr.f32.mxu0 0.0
    %181 = vmatmul.mubr.f32.gmra.mrb[0].mxu0 %v50
    %v182 = vpop.f32.mrb[0].mxu0
    %v183 = vadd.f32 0.0, %v182
    %v184 = vpop.f32.mrb[0].mxu0
    %185 = vmatprep.mubr.f32.mxu0 0.0
    %186 = vmatmul.mubr.f32.gmra.mrb[0].mxu0 %v53
    %v187 = vpop.f32.mrb[0].mxu0
    %v188 = vadd.f32 0.0, %v187
    %v189 = vpop.f32.mrb[0].mxu0
    %190 = vmatprep.mubr.f32.mxu0 0.0
    %191 = vmatmul.mubr.f32.gmra.mrb[0].mxu0 %v56
    %v192 = vpop.f32.mrb[0].mxu0
    %v193 = vadd.f32 0.0, %v192
    %v194 = vpop.f32.mrb[0].mxu0
    %195 = vmatprep.mubr.f32.mxu0 0.0
    %196 = vmatmul.mubr.f32.gmra.mrb[0].mxu0 %v59
    %v197 = vpop.f32.mrb[0].mxu0
    %v198 = vadd.f32 0.0, %v197
    %v199 = vpop.f32.mrb[0].mxu0
    %200 = vmatprep.mubr.f32.mxu0 0.0
    %201 = vmatmul.mubr.f32.gmra.mrb[0].mxu0 %v62
    %v202 = vpop.f32.mrb[0].mxu0
    %v203 = vadd.f32 0.0, %v202
    %v204 = vpop.f32.mrb[0].mxu0
    %205 = vmatprep.mubr.f32.mxu0 0.0
    %206 = vmatmul.mubr.f32.gmra.mrb[0].mxu0 %v65
    %v207 = vpop.f32.mrb[0].mxu0
    %v208 = vadd.f32 0.0, %v207
    %v209 = vpop.f32.mrb[0].mxu0
    %210 = vmatprep.mubr.f32.mxu0 0.0
    %211 = vmatmul.mubr.f32.gmra.mrb[0].mxu0 %v68
    %v212 = vpop.f32.mrb[0].mxu0
    %v213 = vadd.f32 0.0, %v212
    %v214 = vpop.f32.mrb[0].mxu0
    %215 = vmatprep.mubr.f32.mxu0 0.0
    %216 = vmatmul.mubr.f32.gmra.mrb[0].mxu0 %v71
    %v217 = vpop.f32.mrb[0].mxu0
    %v218 = vadd.f32 0.0, %v217
    %v219 = vpop.f32.mrb[0].mxu0
    %220 = vmatprep.mubr.f32.mxu0 0.0
    %221 = vmatmul.mubr.f32.gmra.mrb[0].mxu0 %v74
    %v222 = vpop.f32.mrb[0].mxu0
    %v223 = vadd.f32 0.0, %v222
    %v224 = vpop.f32.mrb[0].mxu0
    %225 = vmatprep.mubr.f32.mxu0 0.0
    %226 = vmatmul.mubr.f32.gmra.mrb[0].mxu0 %v77
    %v227 = vpop.f32.mrb[0].mxu0
    %v228 = vadd.f32 0.0, %v227
    %v229 = vpop.f32.mrb[0].mxu0
    %230 = vmatprep.mubr.f32.mxu0 0.0
    %231 = vmatmul.mubr.f32.gmra.mrb[0].mxu0 %v80
    %v232 = vpop.f32.mrb[0].mxu0
    %v233 = vadd.f32 0.0, %v232
    %v234 = vpop.f32.mrb[0].mxu0
    %235 = vmatprep.mubr.f32.mxu0 0.0
    %236 = vmatmul.mubr.f32.gmra.mrb[0].mxu0 %v83
    %v237 = vpop.f32.mrb[0].mxu0
    %v238 = vadd.f32 0.0, %v237
    %v239 = vpop.f32.mrb[0].mxu0
    %240 = vmatprep.mubr.f32.mxu0 0.0
    %241 = vmatmul.mubr.f32.gmra.mrb[0].mxu0 %v86
    %v242 = vpop.f32.mrb[0].mxu0
    %v243 = vadd.f32 0.0, %v242
    %v244 = vpop.f32.mrb[0].mxu0
    %245 = vmatprep.mubr.f32.mxu0 0.0
    %246 = vmatmul.mubr.f32.gmra.mrb[0].mxu0 %v89
    %v247 = vpop.f32.mrb[0].mxu0
    %v248 = vadd.f32 0.0, %v247
    %v249 = vpop.f32.mrb[0].mxu0
    %250 = vmatprep.mubr.f32.mxu0 0.0
    %251 = vmatmul.mubr.f32.gmra.mrb[0].mxu0 %v92
    %v252 = vpop.f32.mrb[0].mxu0
    %v253 = vadd.f32 0.0, %v252
    %v254 = vpop.f32.mrb[0].mxu0
    %255 = vmatprep.mubr.f32.mxu0 0.0
    %256 = vmatmul.mubr.f32.gmra.mrb[0].mxu0 %v95
    %v257 = vpop.f32.mrb[0].mxu0
    %v258 = vadd.f32 0.0, %v257
    %v259 = vpop.f32.mrb[0].mxu0
    %260 = vdwg.mxu0
    %vm261 = vcmp.ge.f32.partialorder %v168, 0.0
    %vm262 = vcmp.ge.f32.partialorder %v173, 0.0
    %vm263 = vcmp.ge.f32.partialorder %v178, 0.0
    %vm264 = vcmp.ge.f32.partialorder %v183, 0.0
    %vm265 = vcmp.ge.f32.partialorder %v188, 0.0
    %vm266 = vcmp.ge.f32.partialorder %v193, 0.0
    %vm267 = vcmp.ge.f32.partialorder %v198, 0.0
    %vm268 = vcmp.ge.f32.partialorder %v203, 0.0
    %vm269 = vcmp.ge.f32.partialorder %v208, 0.0
    %vm270 = vcmp.ge.f32.partialorder %v213, 0.0
    %vm271 = vcmp.ge.f32.partialorder %v218, 0.0
    %vm272 = vcmp.ge.f32.partialorder %v223, 0.0
    %vm273 = vcmp.ge.f32.partialorder %v228, 0.0
    %vm274 = vcmp.ge.f32.partialorder %v233, 0.0
    %vm275 = vcmp.ge.f32.partialorder %v238, 0.0
    %vm276 = vcmp.ge.f32.partialorder %v243, 0.0
    %v277 = vmul.f32 %v168, 0.01
    %v278 = vmul.f32 %v173, 0.01
    %v279 = vmul.f32 %v178, 0.01
    %v280 = vmul.f32 %v183, 0.01
    %v281 = vmul.f32 %v188, 0.01
    %v282 = vmul.f32 %v193, 0.01
    %v283 = vmul.f32 %v198, 0.01
    %v284 = vmul.f32 %v203, 0.01
    %v285 = vmul.f32 %v208, 0.01
    %v286 = vmul.f32 %v213, 0.01
    %v287 = vmul.f32 %v218, 0.01
    %v288 = vmul.f32 %v223, 0.01
    %v289 = vmul.f32 %v228, 0.01
    %v290 = vmul.f32 %v233, 0.01
    %v291 = vmul.f32 %v238, 0.01
    %v292 = vmul.f32 %v243, 0.01
    %v293 = vsel %vm261, %v168, %v277
    %v294 = vsel %vm262, %v173, %v278
    %v295 = vsel %vm263, %v178, %v279
    %v296 = vsel %vm264, %v183, %v280
    %v297 = vsel %vm265, %v188, %v281
    %v298 = vsel %vm266, %v193, %v282
    %v299 = vsel %vm267, %v198, %v283
    %v300 = vsel %vm268, %v203, %v284
    %v301 = vsel %vm269, %v208, %v285
    %v302 = vsel %vm270, %v213, %v286
    %v303 = vsel %vm271, %v218, %v287
    %v304 = vsel %vm272, %v223, %v288
    %v305 = vsel %vm273, %v228, %v289
    %v306 = vsel %vm274, %v233, %v290
    %v307 = vsel %vm275, %v238, %v291
    %v308 = vsel %vm276, %v243, %v292
    %vm309 = vcmask 64512
    %v310 = vsel %vm309, %v248, -inf
    %v311 = vrot.slane %v310, 4
    %v312 = vmax.f32 %v310, %v311
    %v313 = vrot.slane %v312, 2
    %v314 = vmax.f32 %v312, %v313
    %v315 = vrot.slane %v314, 1
    %v316 = vmax.f32 %v314, %v315
    %v317 = vsel %vm309, %v253, -inf
    %v318 = vrot.slane %v317, 4
    %v319 = vmax.f32 %v317, %v318
    %v320 = vrot.slane %v319, 2
    %v321 = vmax.f32 %v319, %v320
    %v322 = vrot.slane %v321, 1
    %v323 = vmax.f32 %v321, %v322
    %v324 = vsel %vm309, %v258, -inf
    %v325 = vrot.slane %v324, 4
    %v326 = vmax.f32 %v324, %v325
    %v327 = vrot.slane %v326, 2
    %v328 = vmax.f32 %v326, %v327
    %v329 = vrot.slane %v328, 1
    %v330 = vmax.f32 %v328, %v329
    %v331 = vsub.f32 %v248, %v316
    %v332 = vsub.f32 %v253, %v323
    %v333 = vsub.f32 %v258, %v330
    %v334 = vmul.f32 %v331, 1.442695
    %v335 = vpow.pop %v334
    %v336 = vmul.f32 %v332, 1.442695
    %v337 = vpow.pop %v336
    %v338 = vmul.f32 %v333, 1.442695
    %v339 = vpow.pop %v338
    %v340 = vld [vmem:[%s2] sm:$0xff]
    %v341 = vld [vmem:[%s2 + $0x8] sm:$0xff]
    %v342 = vld [vmem:[%s2 + $0x10] sm:$0xff]
    %343 = vmatprep.subr.mxu0 0.0
    %344 = vmatpush1.msra.mxu0 %v293
    %345 = vmatprep.subr.mxu0 0.0
    %346 = vmatpush1.msra.mxu0 %v294
    %347 = vmatprep.subr.mxu0 0.0
    %348 = vmatpush1.msra.mxu0 %v295
    %349 = vmatprep.subr.mxu0 0.0
    %350 = vmatpush1.msra.mxu0 %v296
    %351 = vmatprep.subr.mxu0 0.0
    %352 = vmatpush1.msra.mxu0 %v297
    %353 = vmatprep.subr.mxu0 0.0
    %354 = vmatpush1.msra.mxu0 %v298
    %355 = vmatprep.subr.mxu0 0.0
    %356 = vmatpush1.msra.mxu0 %v299
    %357 = vmatprep.subr.mxu0 0.0
    %358 = vmatpush1.msra.mxu0 %v300
    %359 = vmatprep.subr.mxu0 0.0
    %360 = vmatpush1.msra.mxu0 %v301
    %361 = vmatprep.subr.mxu0 0.0
    %362 = vmatpush1.msra.mxu0 %v302
    %363 = vmatprep.subr.mxu0 0.0
    %364 = vmatpush1.msra.mxu0 %v303
    %365 = vmatprep.subr.mxu0 0.0
    %366 = vmatpush1.msra.mxu0 %v304
    %367 = vmatprep.subr.mxu0 0.0
    %368 = vmatpush1.msra.mxu0 %v305
    %369 = vmatprep.subr.mxu0 0.0
    %370 = vmatpush1.msra.mxu0 %v306
    %371 = vmatprep.subr.mxu0 0.0
    %372 = vmatpush1.msra.mxu0 %v307
    %373 = vmatprep.subr.mxu0 0.0
    %374 = vmatpush1.msra.mxu0 %v308
    %375 = vmatprep.subr.mxu0 0.0
    %376 = vmatpush1.msra.mxu0 0.0
    %377 = vmatprep.subr.mxu0 0.0
    %378 = vmatpush1.msra.mxu0 0.0
    %379 = vmatprep.subr.mxu0 0.0
    %380 = vmatpush1.msra.mxu0 0.0
    %381 = vmatprep.subr.mxu0 0.0
    %382 = vmatpush1.msra.mxu0 0.0
    %383 = vmatprep.subr.mxu0 0.0
    %384 = vmatpush1.msra.mxu0 0.0
    %385 = vmatprep.subr.mxu0 0.0
    %386 = vmatpush1.msra.mxu0 0.0
    %387 = vmatprep.subr.mxu0 0.0
    %388 = vmatpush1.msra.mxu0 0.0
    %389 = vmatprep.subr.mxu0 0.0
    %390 = vmatpush1.msra.mxu0 0.0
    %391 = vmatprep.subr.mxu0 0.0
    %392 = vmatpush1.msra.mxu0 0.0
    %393 = vmatprep.subr.mxu0 0.0
    %394 = vmatpush1.msra.mxu0 0.0
    %395 = vmatprep.subr.mxu0 0.0
    %396 = vmatpush1.msra.mxu0 0.0
    %397 = vmatprep.subr.mxu0 0.0
    %398 = vmatpush1.msra.mxu0 0.0
    %399 = vmatprep.subr.mxu0 0.0
    %400 = vmatpush1.msra.mxu0 0.0
    %401 = vmatprep.subr.mxu0 0.0
    %402 = vmatpush1.msra.mxu0 0.0
    %403 = vmatprep.subr.mxu0 0.0
    %404 = vmatpush1.msra.mxu0 0.0
    %405 = vmatprep.subr.mxu0 0.0
    %406 = vmatpush1.msra.mxu0 0.0
    %407 = vmatprep.mubr.f32.mxu0 0.0
    %408 = vmatmul.mubr.f32.gmra.mrb[0].mxu0 %v340
    %v409 = vpop.f32.mrb[0].mxu0
    %v410 = vadd.f32 0.0, %v409
    %v411 = vpop.f32.mrb[0].mxu0
    %412 = vmatprep.mubr.f32.mxu0 0.0
    %413 = vmatmul.mubr.f32.gmra.mrb[0].mxu0 %v341
    %v414 = vpop.f32.mrb[0].mxu0
    %v415 = vadd.f32 0.0, %v414
    %v416 = vpop.f32.mrb[0].mxu0
    %417 = vmatprep.mubr.f32.mxu0 0.0
    %418 = vmatmul.mubr.f32.gmra.mrb[0].mxu0 %v342
    %v419 = vpop.f32.mrb[0].mxu0
    %v420 = vadd.f32 0.0, %v419
    %v421 = vpop.f32.mrb[0].mxu0
    %422 = vdwg.mxu0
    %v423 = vmul.f32 %v335, %v410
    %v424 = vmul.f32 %v337, %v415
    %v425 = vmul.f32 %v339, %v420
    %v426 = vsel %vm309, %v423, 0.0
    %v427 = vrot.slane %v426, 4
    %v428 = vadd.f32 %v426, %v427
    %v429 = vrot.slane %v428, 2
    %v430 = vadd.f32 %v428, %v429
    %v431 = vrot.slane %v430, 1
    %v432 = vadd.f32 %v430, %v431
    %v433 = vsel %vm309, %v424, 0.0
    %v434 = vrot.slane %v433, 4
    %v435 = vadd.f32 %v433, %v434
    %v436 = vrot.slane %v435, 2
    %v437 = vadd.f32 %v435, %v436
    %v438 = vrot.slane %v437, 1
    %v439 = vadd.f32 %v437, %v438
    %v440 = vsel %vm309, %v425, 0.0
    %v441 = vrot.slane %v440, 4
    %v442 = vadd.f32 %v440, %v441
    %v443 = vrot.slane %v442, 2
    %v444 = vadd.f32 %v442, %v443
    %v445 = vrot.slane %v444, 1
    %v446 = vadd.f32 %v444, %v445
    %v447 = vsel %vm309, %v335, 0.0
    %v448 = vrot.slane %v447, 4
    %v449 = vadd.f32 %v447, %v448
    %v450 = vrot.slane %v449, 2
    %v451 = vadd.f32 %v449, %v450
    %v452 = vrot.slane %v451, 1
    %v453 = vadd.f32 %v451, %v452
    %v454 = vsel %vm309, %v337, 0.0
    %v455 = vrot.slane %v454, 4
    %v456 = vadd.f32 %v454, %v455
    %v457 = vrot.slane %v456, 2
    %v458 = vadd.f32 %v456, %v457
    %v459 = vrot.slane %v458, 1
    %v460 = vadd.f32 %v458, %v459
    %v461 = vsel %vm309, %v339, 0.0
    %v462 = vrot.slane %v461, 4
    %v463 = vadd.f32 %v461, %v462
    %v464 = vrot.slane %v463, 2
    %v465 = vadd.f32 %v463, %v464
    %v466 = vrot.slane %v465, 1
    %v467 = vadd.f32 %v465, %v466
    %v468 = vrcp.pop %v453
    %v469 = vrcp.pop %v460
    %v470 = vrcp.pop %v467
    %v471 = vmul.f32 %v432, %v468
    %v472 = vmul.f32 %v439, %v469
    %v473 = vmul.f32 %v446, %v470
    %v474 = vld [vmem:[%s3] sm:$0x7]
    %476 = vset.pattern.permute.xlu0 0
    %477 = vperm.xlu0 %476, %v474
    %v478 = vpop.permute.xlu0 %477
    %v479 = vrot.slane %v478, 1
    %v480 = vrot.slane %v478, 2
    %v484 = vadd.f32 %v471, %v478
    %v485 = vadd.f32 %v472, %v479
    %v486 = vadd.f32 %v473, %v480
    %v490 = vrot.slane %v485, 7
    %vm491 = vcmask 1041409
    %v492 = vsel %vm491, %v490, %v484
    %v493 = vrot.slane %v486, 6
    %vm494 = vcmask 1042434
    %v495 = vsel %vm494, %v493, %v492
    %vm497 = vcmask 59392
    %498 = vst.msk [vmem:[#allocation2] sm:$0x7] %vm497, %v495
    // Predicated region
    $region18: #{tpu_custom_call.1} parent=1 // pred_check
      _
    $region19: #{tpu_custom_call.1} parent=1 // pred_check_branch
      %500 = sbr.rel (0) target = $region21
    $region20: #{tpu_custom_call.1} parent=1 // pred_region
      %s502 = ssub.s32 64, 64
      %503 = vsyncadd [#allocation3], %s502
      %s505 = sshll.u32 [#allocation2], 4
      %s506 = int_to_ptr.vmem [resolvable:$true] %s505
      %508 = dma.vmem_to_hbm [thread:$0]  %s506, 64, %s4, [#allocation3]
    $region21: #{tpu_custom_call.1} parent=1 // pred_fallthru
      _
    // Predicated region
    $region22: #{tpu_custom_call.1} parent=1 // pred_check
      _
    $region23: #{tpu_custom_call.1} parent=1 // pred_check_branch
      %510 = sbr.rel (0) target = $region25
    $region24: #{tpu_custom_call.1} parent=1 // pred_region
      %511 = dma.done [#allocation3], 64
    $region25: #{tpu_custom_call.1} parent=1 // pred_fallthru
      _
    %512 = vsyncpa [#allocation3], 1

</llo_original>
